<compile_context>
chip_gen: v5e
topology: v5e:2x2
jax: 0.10.0
libtpu: 0.0.40
codegen_flags: <defaults>
</compile_context>

<pallas_src>
import functools

import jax
import jax.numpy as jnp
from jax.experimental import pallas as pl
from jax.experimental.pallas import tpu as pltpu


# --------------------------------- kernel ------------------------------------

def euler_kernel(init_ref, ay_ref, w1e_ref, b1e_ref, rhs_ref, b2_ref,
                 out_ref, u_ref):
    """One (batch_tile, time_chunk) grid point.

    The state for the whole batch tile is a single (B_TILE*H, W) slab carried
    across time chunks in the VMEM scratch `u_ref`.
    """
    tc = pl.program_id(1)                      # time-chunk index ("arbitrary" axis)
    b_tile, t_chunk, h, w = out_ref.shape
    m = b_tile * h                             # MXU M dimension
    ke = w1e_ref.shape[1]                      # HID + W
    hid = ke - w

    # Hoist weights / broadcasts / masks out of the time loop (JAX does not CSE
    # broadcast_in_dim).
    ay = ay_ref[...]                                   # (M, M) = I + dt*blockdiag(Ay)
    w1e = w1e_ref[...]                                 # (W, HID+W) = [W1 | I]
    rhs = rhs_ref[...]                                 # (HID+W, W) = dt*[W2 ; Ax]
    b1e = jnp.broadcast_to(b1e_ref[...], (m, ke))      # [b1 | 0]
    b2 = jnp.broadcast_to(b2_ref[...], (m, w))         # dt*b2
    tanh_cols = jax.lax.broadcasted_iota(jnp.int32, (m, ke), 1) < hid

    def euler_step(u):
        # ze = [u @ W1 + b1 | u]; masked tanh keeps the identity columns linear.
        ze = jnp.dot(u, w1e, preferred_element_type=jnp.float32) + b1e
        hu = jnp.where(tanh_cols, jnp.tanh(ze), ze)     # [tanh(u@W1+b1) | u]
        # dt*(nonpara MLP + x-direction stencil + c*u), one right matmul.
        mx = jnp.dot(hu, rhs, preferred_element_type=jnp.float32) + b2
        # u + dt*(y-direction stencil) via the identity-folded left matmul.
        return jnp.dot(ay, u, preferred_element_type=jnp.float32) + mx

    # First chunk of each batch tile: load the initial condition into the carry.
    @pl.when(tc == 0)
    def _():
        for bb in range(b_tile):                        # static unroll, small
            u_ref[bb * h:(bb + 1) * h, :] = init_ref[bb, :, :].astype(jnp.float32)

    def body(j, u):
        # Store-then-step: local index j of this chunk holds the *current* state.
        for bb in range(b_tile):                        # static unroll, small
            out_ref[bb, j, :, :] = u[bb * h:(bb + 1) * h, :]
        return euler_step(u)

    # Fixed trip count for every chunk; the value left in u_ref is exactly the
    # state the next chunk starts from.  (Last chunk computes one extra, unused
    # derivative - one wasted eval per batch tile.)  Unroll capped to bound vreg
    # live ranges at production T_CHUNK.
    u_final = jax.lax.fori_loop(0, t_chunk, body, u_ref[...],
                                unroll=min(t_chunk, 8))
    u_ref[...] = u_final


# --------------------------------- wrapper -----------------------------------

def _largest_divisor_leq(n, cap):
    cap = int(max(1, min(n, cap)))
    for d in range(cap, 0, -1):
        if n % d == 0:
            return d
    return 1


def _round_up(x, m):
    return (x + m - 1) // m * m


@functools.partial(jax.jit, static_argnames=("b_tile", "t_chunk"))
def semi_parametric_forward(init_value, t, coefs, w1, b1, w2, b2,
                            *, b_tile=None, t_chunk=None):
    """ODE trajectory of SemiParametericModel.forward, shape (B, T, H, W) f32."""
    f32 = jnp.float32
    B, H, W = init_value.shape
    T = t.shape[0]
    HID = w1.shape[1]
    a, cb1, cb2, c = coefs[0], coefs[1], coefs[2], coefs[3]

    # Batch tiling: fill the MXU M dimension (aim for B_TILE*H ~ 256 rows).
    if b_tile is None:
        b_tile = _largest_divisor_leq(B, max(1, 256 // H))
    # Time chunking: bound the VMEM-resident (lane-padded, double-buffered)
    # output block to ~8 MiB, safe against v7x's 32 MiB scoped VMEM.
    if t_chunk is None:
        per_idx = b_tile * _round_up(H, 8) * _round_up(W, 128) * 4 * 2
        t_chunk = _largest_divisor_leq(T, max(1, (8 << 20) // per_idx))
    assert B % b_tile == 0 and T % t_chunk == 0
    M = b_tile * H

    eye_h = jnp.eye(H, dtype=f32)
    eye_w = jnp.eye(W, dtype=f32)

    # Periodic shift operators as circulant matrices (built once, outside kernel).
    r_p = jnp.roll(eye_h, 1, axis=0)      # R_p @ u == roll(u, +1, axis=H)
    r_m = jnp.roll(eye_h, -1, axis=0)     # R_m @ u == roll(u, -1, axis=H)
    s_p = jnp.roll(eye_w, -1, axis=0)     # u @ S_p == roll(u, +1, axis=W)
    s_m = jnp.roll(eye_w, 1, axis=0)      # u @ S_m == roll(u, -1, axis=W)

    # a*Lap + b1*du/dy + b2*du/dx + c*u  ==  Ay @ u + u @ Ax
    ay = a * (r_p + r_m - 2.0 * eye_h) + cb1 * 0.5 * (r_m - r_p)
    ax = a * (s_p + s_m - 2.0 * eye_w) + cb2 * 0.5 * (s_m - s_p) + c * eye_w

    # Euler step size folded into the operators once (t is the uniform Euler
    # grid); the in-kernel update is then  u_new = Ay_eff @ u + hu @ rhs + b2.
    dt = (t[1] - t[0]).astype(f32)
    # Block-diagonal, identity-folded y-operator acting on the (B_TILE*H, W) slab.
    ay_eff = jnp.eye(M, dtype=f32) + dt * jnp.kron(jnp.eye(b_tile, dtype=f32), ay)
    # Fuse the x-direction stencil into the MLP's second matmul:
    #   [tanh(u@W1+b1) | u] @ dt*[[W2],[Ax]]  =  dt*(nonpara(u) + u @ Ax)
    w1e = jnp.concatenate([w1.astype(f32), eye_w], axis=1)                   # (W, HID+W)
    b1e = jnp.concatenate([b1.astype(f32), jnp.zeros((1, W), f32)], axis=1)  # (1, HID+W)
    rhs = dt * jnp.concatenate([w2.astype(f32), ax], axis=0)                 # (HID+W, W)
    b2e = dt * b2.astype(f32)                                                # (1, W)

    grid = (B // b_tile, T // t_chunk)
    kernel = pl.pallas_call(
        euler_kernel,
        out_shape=jax.ShapeDtypeStruct((B, T, H, W), f32),
        grid_spec=pltpu.PrefetchScalarGridSpec(
            num_scalar_prefetch=0,
            grid=grid,
            in_specs=[
                pl.BlockSpec((b_tile, H, W), lambda bt, tc: (bt, 0, 0)),      # init
                pl.BlockSpec((M, M), lambda bt, tc: (0, 0)),                  # I+dt*Ay
                pl.BlockSpec((W, HID + W), lambda bt, tc: (0, 0)),            # [W1 | I]
                pl.BlockSpec((1, HID + W), lambda bt, tc: (0, 0)),            # [b1 | 0]
                pl.BlockSpec((HID + W, W), lambda bt, tc: (0, 0)),            # dt*[W2;Ax]
                pl.BlockSpec((1, W), lambda bt, tc: (0, 0)),                  # dt*b2
            ],
            # Natural (B, T, H, W) layout; lane-dense output only pays off when
            # W (or a fused H*W last dim) reaches 128, which it does not here.
            out_specs=pl.BlockSpec((b_tile, t_chunk, H, W),
                                   lambda bt, tc: (bt, tc, 0, 0)),
            scratch_shapes=[pltpu.VMEM((M, W), f32)],     # state carried across T chunks
        ),
        compiler_params=pltpu.CompilerParams(
            # Batch tiles are independent; the time-chunk axis carries state and
            # must remain sequential.
            dimension_semantics=("parallel", "arbitrary"),
            # Raised above v5e's 16 MiB scoped default; still safe on v7x (64 MiB).
            vmem_limit_bytes=32 * 1024 * 1024,
        ),
    )
    return kernel(init_value.astype(f32), ay_eff, w1e, b1e, rhs, b2e)


# ----------------------------- pure-JAX reference ----------------------------

def _laplacian(u):
    return (jnp.roll(u, 1, axis=1) + jnp.roll(u, -1, axis=1)
            + jnp.roll(u, 1, axis=2) + jnp.roll(u, -1, axis=2) - 4.0 * u)


def _gradients(u):
    gy = 0.5 * (jnp.roll(u, -1, axis=1) - jnp.roll(u, 1, axis=1))
    gx = 0.5 * (jnp.roll(u, -1, axis=2) - jnp.roll(u, 1, axis=2))
    return gy, gx


def _derivative_ref(u, coefs, w1, b1, w2, b2):
    B, H, W = u.shape
    a, cb1, cb2, c = coefs
    lap = _laplacian(u)
    gy, gx = _gradients(u)
    para = a * lap + cb1 * gy + cb2 * gx + c * u
    u2 = u.reshape(B * H, W)
    h = jnp.tanh(jnp.dot(u2, w1, preferred_element_type=jnp.float32) + b1)
    nl = jnp.dot(h, w2, preferred_element_type=jnp.float32) + b2
    return para + nl.reshape(B, H, W)


@jax.jit
def reference_forward(init_value, t, coefs, w1, b1, w2, b2):
    coefs_tup = (coefs[0], coefs[1], coefs[2], coefs[3])

    def step(state, i):
        dt = t[i] - t[i - 1]
        new = state + dt * _derivative_ref(state, coefs_tup, w1, b1, w2, b2)
        return new, new

    _, traj = jax.lax.scan(step, init_value, jnp.arange(1, t.shape[0]))
    sol = jnp.concatenate([init_value[None], traj], axis=0)   # (T, B, H, W)
    return jnp.transpose(sol, (1, 0, 2, 3))                   # permute(1, 0, 2, 3)


# ----------------------------------- main ------------------------------------

if __name__ == "__main__":
    B, H, W, HID, T = 4, 16, 16, 32, 8
    STEP_SIZE = 0.02

    key = jax.random.PRNGKey(0)
    k_init, k_w1, k_b1, k_w2, k_b2 = jax.random.split(key, 5)

    init_value = 0.1 * jax.random.normal(k_init, (B, H, W), dtype=jnp.float32)
    t = jnp.arange(T, dtype=jnp.float32) * STEP_SIZE          # fixed Euler grid

    coefs = jnp.array([0.10, 0.05, -0.03, -0.20], dtype=jnp.float32)  # a, b1, b2, c
    w1 = 0.1 * jax.random.normal(k_w1, (W, HID), dtype=jnp.float32)
    b1 = 0.1 * jax.random.normal(k_b1, (1, HID), dtype=jnp.float32)
    w2 = 0.1 * jax.random.normal(k_w2, (HID, W), dtype=jnp.float32)
    b2 = 0.1 * jax.random.normal(k_b2, (1, W), dtype=jnp.float32)

    # b_tile=2 / t_chunk=4 deliberately exercise both the batch-tile grid axis
    # and the cross-chunk state carry at this toy size (the auto defaults would
    # pick b_tile=4, t_chunk=8, i.e. a single grid point).
    out = semi_parametric_forward(init_value, t, coefs, w1, b1, w2, b2,
                                  b_tile=2, t_chunk=4)
    out = jax.block_until_ready(out)

    ref = jax.block_until_ready(
        reference_forward(init_value, t, coefs, w1, b1, w2, b2))

    assert out.shape == (B, T, H, W), out.shape
    err = float(jnp.max(jnp.abs(out - ref)))
    assert jnp.allclose(out, ref, rtol=2e-4, atol=2e-4), f"max err {err}"

    print("KERNEL_OK")
</pallas_src>

<mosaic_0001>
module attributes {stable_mosaic.version = 11 : i64} {
  func.func @euler_kernel(%arg0: i32, %arg1: i32, %arg2: memref<2x16x16xf32, #tpu.memory_space<vmem>>, %arg3: memref<32x32xf32, #tpu.memory_space<vmem>>, %arg4: memref<16x48xf32, #tpu.memory_space<vmem>>, %arg5: memref<1x48xf32, #tpu.memory_space<vmem>>, %arg6: memref<48x16xf32, #tpu.memory_space<vmem>>, %arg7: memref<1x16xf32, #tpu.memory_space<vmem>>, %arg8: memref<2x4x16x16xf32, #tpu.memory_space<vmem>>, %arg9: memref<32x16xf32, #tpu.memory_space<vmem>>) attributes {dimension_semantics = [#tpu.dimension_semantics<parallel>, #tpu.dimension_semantics<arbitrary>], iteration_bounds = array<i64: 2, 2>, scalar_prefetch = 0 : i64, scratch_operands = 1 : i64, tpu.core_type = #tpu.core_type<tc>, window_params = [{transform_indices = @transform_0, window_bounds = array<i64: 2, 16, 16>}, {pipeline_mode = #tpu.pipeline_mode<synchronous>, transform_indices = @transform_1, window_bounds = array<i64: 32, 32>}, {pipeline_mode = #tpu.pipeline_mode<synchronous>, transform_indices = @transform_2, window_bounds = array<i64: 16, 48>}, {pipeline_mode = #tpu.pipeline_mode<synchronous>, transform_indices = @transform_3, window_bounds = array<i64: 1, 48>}, {pipeline_mode = #tpu.pipeline_mode<synchronous>, transform_indices = @transform_4, window_bounds = array<i64: 48, 16>}, {pipeline_mode = #tpu.pipeline_mode<synchronous>, transform_indices = @transform_5, window_bounds = array<i64: 1, 16>}, {transform_indices = @transform_6, window_bounds = array<i64: 2, 4, 16, 16>}]} {
    %c0 = arith.constant 0 : index
    %c0_0 = arith.constant 0 : index
    %0 = vector.load %arg3[%c0, %c0_0] : memref<32x32xf32, #tpu.memory_space<vmem>>, vector<32x32xf32>
    %c0_1 = arith.constant 0 : index
    %c0_2 = arith.constant 0 : index
    %1 = vector.load %arg4[%c0_1, %c0_2] : memref<16x48xf32, #tpu.memory_space<vmem>>, vector<16x48xf32>
    %c0_3 = arith.constant 0 : index
    %c0_4 = arith.constant 0 : index
    %2 = vector.load %arg6[%c0_3, %c0_4] : memref<48x16xf32, #tpu.memory_space<vmem>>, vector<48x16xf32>
    %c0_5 = arith.constant 0 : index
    %c0_6 = arith.constant 0 : index
    %3 = vector.load %arg5[%c0_5, %c0_6] : memref<1x48xf32, #tpu.memory_space<vmem>>, vector<1x48xf32>
    %4 = vector.shape_cast %3 : vector<1x48xf32> to vector<1x48xf32>
    %5 = vector.broadcast %4 : vector<1x48xf32> to vector<32x48xf32>
    %c0_7 = arith.constant 0 : index
    %c0_8 = arith.constant 0 : index
    %6 = vector.load %arg7[%c0_7, %c0_8] : memref<1x16xf32, #tpu.memory_space<vmem>>, vector<1x16xf32>
    %7 = vector.shape_cast %6 : vector<1x16xf32> to vector<1x16xf32>
    %8 = vector.broadcast %7 : vector<1x16xf32> to vector<32x16xf32>
    %9 = tpu.iota {dimensions = array<i32: 1>} : vector<32x48xi32>
    %c32_i32 = arith.constant 32 : i32
    %10 = vector.broadcast %c32_i32 : i32 to vector<32x48xi32>
    %11 = arith.cmpi slt, %9, %10 : vector<32x48xi32>
    %c0_i32 = arith.constant 0 : i32
    %12 = arith.cmpi eq, %arg1, %c0_i32 : i32
    %13 = arith.extui %12 : i1 to i32
    %c0_i32_9 = arith.constant 0 : i32
    %14 = arith.cmpi ne, %13, %c0_i32_9 : i32
    scf.if %14 {
      %c0_49 = arith.constant 0 : index
      %c0_50 = arith.constant 0 : index
      %c0_51 = arith.constant 0 : index
      %89 = vector.load %arg2[%c0_49, %c0_50, %c0_51] : memref<2x16x16xf32, #tpu.memory_space<vmem>>, vector<1x16x16xf32>
      %90 = vector.shape_cast %89 : vector<1x16x16xf32> to vector<16x16xf32>
      %c0_52 = arith.constant 0 : index
      %c0_53 = arith.constant 0 : index
      %91 = vector.load %arg9[%c0_52, %c0_53] : memref<32x16xf32, #tpu.memory_space<vmem>>, vector<16x16xf32>
      tpu.vector_store %arg9[%c0_52, %c0_53], %90 {strides = array<i32>} : memref<32x16xf32, #tpu.memory_space<vmem>>, vector<16x16xf32>,
      %c1_54 = arith.constant 1 : index
      %c0_55 = arith.constant 0 : index
      %c0_56 = arith.constant 0 : index
      %92 = vector.load %arg2[%c1_54, %c0_55, %c0_56] : memref<2x16x16xf32, #tpu.memory_space<vmem>>, vector<1x16x16xf32>
      %93 = vector.shape_cast %92 : vector<1x16x16xf32> to vector<16x16xf32>
      %c16 = arith.constant 16 : index
      %c0_57 = arith.constant 0 : index
      %94 = vector.load %arg9[%c16, %c0_57] : memref<32x16xf32, #tpu.memory_space<vmem>>, vector<16x16xf32>
      tpu.vector_store %arg9[%c16, %c0_57], %93 {strides = array<i32>} : memref<32x16xf32, #tpu.memory_space<vmem>>, vector<16x16xf32>,
    } else {
    }
    %c0_10 = arith.constant 0 : index
    %c0_11 = arith.constant 0 : index
    %15 = vector.load %arg9[%c0_10, %c0_11] : memref<32x16xf32, #tpu.memory_space<vmem>>, vector<32x16xf32>
    %c0_i32_12 = arith.constant 0 : i32
    %16 = vector.extract_strided_slice %15 {offsets = [0, 0], sizes = [16, 16], strides = [1, 1]} : vector<32x16xf32> to vector<16x16xf32>
    %c0_13 = arith.constant 0 : index
    %17 = arith.index_cast %c0_i32_12 : i32 to index
    %c0_14 = arith.constant 0 : index
    %c0_15 = arith.constant 0 : index
    %18 = vector.load %arg8[%c0_13, %17, %c0_14, %c0_15] : memref<2x4x16x16xf32, #tpu.memory_space<vmem>>, vector<1x1x16x16xf32>
    %19 = vector.shape_cast %18 : vector<1x1x16x16xf32> to vector<16x16xf32>
    %20 = vector.shape_cast %16 : vector<16x16xf32> to vector<1x1x16x16xf32>
    tpu.vector_store %arg8[%c0_13, %17, %c0_14, %c0_15], %20 {strides = array<i32>} : memref<2x4x16x16xf32, #tpu.memory_space<vmem>>, vector<1x1x16x16xf32>,
    %21 = vector.extract_strided_slice %15 {offsets = [16, 0], sizes = [16, 16], strides = [1, 1]} : vector<32x16xf32> to vector<16x16xf32>
    %c1 = arith.constant 1 : index
    %22 = arith.index_cast %c0_i32_12 : i32 to index
    %c0_16 = arith.constant 0 : index
    %c0_17 = arith.constant 0 : index
    %23 = vector.load %arg8[%c1, %22, %c0_16, %c0_17] : memref<2x4x16x16xf32, #tpu.memory_space<vmem>>, vector<1x1x16x16xf32>
    %24 = vector.shape_cast %23 : vector<1x1x16x16xf32> to vector<16x16xf32>
    %25 = vector.shape_cast %21 : vector<16x16xf32> to vector<1x1x16x16xf32>
    tpu.vector_store %arg8[%c1, %22, %c0_16, %c0_17], %25 {strides = array<i32>} : memref<2x4x16x16xf32, #tpu.memory_space<vmem>>, vector<1x1x16x16xf32>,
    %cst = arith.constant dense<0.000000e+00> : vector<32x48xf32>
    %26 = tpu.matmul %15, %1, %cst {dimension_numbers = #tpu.dot_dimension_numbers<[1], [0], [0], [1], [0, 0, 1, 1], [], []>} : vector<32x16xf32>, vector<16x48xf32>, vector<32x48xf32> -> vector<32x48xf32>
    %27 = arith.addf %26, %5 : vector<32x48xf32>
    %28 = math.tanh %27 : vector<32x48xf32>
    %29 = arith.select %11, %28, %27 : vector<32x48xi1>, vector<32x48xf32>
    %cst_18 = arith.constant dense<0.000000e+00> : vector<32x16xf32>
    %30 = tpu.matmul %29, %2, %cst_18 {dimension_numbers = #tpu.dot_dimension_numbers<[1], [0], [0], [1], [0, 0, 1, 1], [], []>} : vector<32x48xf32>, vector<48x16xf32>, vector<32x16xf32> -> vector<32x16xf32>
    %31 = arith.addf %30, %8 : vector<32x16xf32>
    %cst_19 = arith.constant dense<0.000000e+00> : vector<32x16xf32>
    %32 = tpu.matmul %0, %15, %cst_19 {dimension_numbers = #tpu.dot_dimension_numbers<[1], [0], [0], [1], [0, 0, 1, 1], [], []>} : vector<32x32xf32>, vector<32x16xf32>, vector<32x16xf32> -> vector<32x16xf32>
    %33 = arith.addf %32, %31 : vector<32x16xf32>
    %c1_i32 = arith.constant 1 : i32
    %34 = vector.extract_strided_slice %33 {offsets = [0, 0], sizes = [16, 16], strides = [1, 1]} : vector<32x16xf32> to vector<16x16xf32>
    %c0_20 = arith.constant 0 : index
    %35 = arith.index_cast %c1_i32 : i32 to index
    %c0_21 = arith.constant 0 : index
    %c0_22 = arith.constant 0 : index
    %36 = vector.load %arg8[%c0_20, %35, %c0_21, %c0_22] : memref<2x4x16x16xf32, #tpu.memory_space<vmem>>, vector<1x1x16x16xf32>
    %37 = vector.shape_cast %36 : vector<1x1x16x16xf32> to vector<16x16xf32>
    %38 = vector.shape_cast %34 : vector<16x16xf32> to vector<1x1x16x16xf32>
    tpu.vector_store %arg8[%c0_20, %35, %c0_21, %c0_22], %38 {strides = array<i32>} : memref<2x4x16x16xf32, #tpu.memory_space<vmem>>, vector<1x1x16x16xf32>,
    %39 = vector.extract_strided_slice %33 {offsets = [16, 0], sizes = [16, 16], strides = [1, 1]} : vector<32x16xf32> to vector<16x16xf32>
    %c1_23 = arith.constant 1 : index
    %40 = arith.index_cast %c1_i32 : i32 to index
    %c0_24 = arith.constant 0 : index
    %c0_25 = arith.constant 0 : index
    %41 = vector.load %arg8[%c1_23, %40, %c0_24, %c0_25] : memref<2x4x16x16xf32, #tpu.memory_space<vmem>>, vector<1x1x16x16xf32>
    %42 = vector.shape_cast %41 : vector<1x1x16x16xf32> to vector<16x16xf32>
    %43 = vector.shape_cast %39 : vector<16x16xf32> to vector<1x1x16x16xf32>
    tpu.vector_store %arg8[%c1_23, %40, %c0_24, %c0_25], %43 {strides = array<i32>} : memref<2x4x16x16xf32, #tpu.memory_space<vmem>>, vector<1x1x16x16xf32>,
    %cst_26 = arith.constant dense<0.000000e+00> : vector<32x48xf32>
    %44 = tpu.matmul %33, %1, %cst_26 {dimension_numbers = #tpu.dot_dimension_numbers<[1], [0], [0], [1], [0, 0, 1, 1], [], []>} : vector<32x16xf32>, vector<16x48xf32>, vector<32x48xf32> -> vector<32x48xf32>
    %45 = arith.addf %44, %5 : vector<32x48xf32>
    %46 = math.tanh %45 : vector<32x48xf32>
    %47 = arith.select %11, %46, %45 : vector<32x48xi1>, vector<32x48xf32>
    %cst_27 = arith.constant dense<0.000000e+00> : vector<32x16xf32>
    %48 = tpu.matmul %47, %2, %cst_27 {dimension_numbers = #tpu.dot_dimension_numbers<[1], [0], [0], [1], [0, 0, 1, 1], [], []>} : vector<32x48xf32>, vector<48x16xf32>, vector<32x16xf32> -> vector<32x16xf32>
    %49 = arith.addf %48, %8 : vector<32x16xf32>
    %cst_28 = arith.constant dense<0.000000e+00> : vector<32x16xf32>
    %50 = tpu.matmul %0, %33, %cst_28 {dimension_numbers = #tpu.dot_dimension_numbers<[1], [0], [0], [1], [0, 0, 1, 1], [], []>} : vector<32x32xf32>, vector<32x16xf32>, vector<32x16xf32> -> vector<32x16xf32>
    %51 = arith.addf %50, %49 : vector<32x16xf32>
    %c2_i32 = arith.constant 2 : i32
    %52 = vector.extract_strided_slice %51 {offsets = [0, 0], sizes = [16, 16], strides = [1, 1]} : vector<32x16xf32> to vector<16x16xf32>
    %c0_29 = arith.constant 0 : index
    %53 = arith.index_cast %c2_i32 : i32 to index
    %c0_30 = arith.constant 0 : index
    %c0_31 = arith.constant 0 : index
    %54 = vector.load %arg8[%c0_29, %53, %c0_30, %c0_31] : memref<2x4x16x16xf32, #tpu.memory_space<vmem>>, vector<1x1x16x16xf32>
    %55 = vector.shape_cast %54 : vector<1x1x16x16xf32> to vector<16x16xf32>
    %56 = vector.shape_cast %52 : vector<16x16xf32> to vector<1x1x16x16xf32>
    tpu.vector_store %arg8[%c0_29, %53, %c0_30, %c0_31], %56 {strides = array<i32>} : memref<2x4x16x16xf32, #tpu.memory_space<vmem>>, vector<1x1x16x16xf32>,
    %57 = vector.extract_strided_slice %51 {offsets = [16, 0], sizes = [16, 16], strides = [1, 1]} : vector<32x16xf32> to vector<16x16xf32>
    %c1_32 = arith.constant 1 : index
    %58 = arith.index_cast %c2_i32 : i32 to index
    %c0_33 = arith.constant 0 : index
    %c0_34 = arith.constant 0 : index
    %59 = vector.load %arg8[%c1_32, %58, %c0_33, %c0_34] : memref<2x4x16x16xf32, #tpu.memory_space<vmem>>, vector<1x1x16x16xf32>
    %60 = vector.shape_cast %59 : vector<1x1x16x16xf32> to vector<16x16xf32>
    %61 = vector.shape_cast %57 : vector<16x16xf32> to vector<1x1x16x16xf32>
    tpu.vector_store %arg8[%c1_32, %58, %c0_33, %c0_34], %61 {strides = array<i32>} : memref<2x4x16x16xf32, #tpu.memory_space<vmem>>, vector<1x1x16x16xf32>,
    %cst_35 = arith.constant dense<0.000000e+00> : vector<32x48xf32>
    %62 = tpu.matmul %51, %1, %cst_35 {dimension_numbers = #tpu.dot_dimension_numbers<[1], [0], [0], [1], [0, 0, 1, 1], [], []>} : vector<32x16xf32>, vector<16x48xf32>, vector<32x48xf32> -> vector<32x48xf32>
    %63 = arith.addf %62, %5 : vector<32x48xf32>
    %64 = math.tanh %63 : vector<32x48xf32>
    %65 = arith.select %11, %64, %63 : vector<32x48xi1>, vector<32x48xf32>
    %cst_36 = arith.constant dense<0.000000e+00> : vector<32x16xf32>
    %66 = tpu.matmul %65, %2, %cst_36 {dimension_numbers = #tpu.dot_dimension_numbers<[1], [0], [0], [1], [0, 0, 1, 1], [], []>} : vector<32x48xf32>, vector<48x16xf32>, vector<32x16xf32> -> vector<32x16xf32>
    %67 = arith.addf %66, %8 : vector<32x16xf32>
    %cst_37 = arith.constant dense<0.000000e+00> : vector<32x16xf32>
    %68 = tpu.matmul %0, %51, %cst_37 {dimension_numbers = #tpu.dot_dimension_numbers<[1], [0], [0], [1], [0, 0, 1, 1], [], []>} : vector<32x32xf32>, vector<32x16xf32>, vector<32x16xf32> -> vector<32x16xf32>
    %69 = arith.addf %68, %67 : vector<32x16xf32>
    %c3_i32 = arith.constant 3 : i32
    %70 = vector.extract_strided_slice %69 {offsets = [0, 0], sizes = [16, 16], strides = [1, 1]} : vector<32x16xf32> to vector<16x16xf32>
    %c0_38 = arith.constant 0 : index
    %71 = arith.index_cast %c3_i32 : i32 to index
    %c0_39 = arith.constant 0 : index
    %c0_40 = arith.constant 0 : index
    %72 = vector.load %arg8[%c0_38, %71, %c0_39, %c0_40] : memref<2x4x16x16xf32, #tpu.memory_space<vmem>>, vector<1x1x16x16xf32>
    %73 = vector.shape_cast %72 : vector<1x1x16x16xf32> to vector<16x16xf32>
    %74 = vector.shape_cast %70 : vector<16x16xf32> to vector<1x1x16x16xf32>
    tpu.vector_store %arg8[%c0_38, %71, %c0_39, %c0_40], %74 {strides = array<i32>} : memref<2x4x16x16xf32, #tpu.memory_space<vmem>>, vector<1x1x16x16xf32>,
    %75 = vector.extract_strided_slice %69 {offsets = [16, 0], sizes = [16, 16], strides = [1, 1]} : vector<32x16xf32> to vector<16x16xf32>
    %c1_41 = arith.constant 1 : index
    %76 = arith.index_cast %c3_i32 : i32 to index
    %c0_42 = arith.constant 0 : index
    %c0_43 = arith.constant 0 : index
    %77 = vector.load %arg8[%c1_41, %76, %c0_42, %c0_43] : memref<2x4x16x16xf32, #tpu.memory_space<vmem>>, vector<1x1x16x16xf32>
    %78 = vector.shape_cast %77 : vector<1x1x16x16xf32> to vector<16x16xf32>
    %79 = vector.shape_cast %75 : vector<16x16xf32> to vector<1x1x16x16xf32>
    tpu.vector_store %arg8[%c1_41, %76, %c0_42, %c0_43], %79 {strides = array<i32>} : memref<2x4x16x16xf32, #tpu.memory_space<vmem>>, vector<1x1x16x16xf32>,
    %cst_44 = arith.constant dense<0.000000e+00> : vector<32x48xf32>
    %80 = tpu.matmul %69, %1, %cst_44 {dimension_numbers = #tpu.dot_dimension_numbers<[1], [0], [0], [1], [0, 0, 1, 1], [], []>} : vector<32x16xf32>, vector<16x48xf32>, vector<32x48xf32> -> vector<32x48xf32>
    %81 = arith.addf %80, %5 : vector<32x48xf32>
    %82 = math.tanh %81 : vector<32x48xf32>
    %83 = arith.select %11, %82, %81 : vector<32x48xi1>, vector<32x48xf32>
    %cst_45 = arith.constant dense<0.000000e+00> : vector<32x16xf32>
    %84 = tpu.matmul %83, %2, %cst_45 {dimension_numbers = #tpu.dot_dimension_numbers<[1], [0], [0], [1], [0, 0, 1, 1], [], []>} : vector<32x48xf32>, vector<48x16xf32>, vector<32x16xf32> -> vector<32x16xf32>
    %85 = arith.addf %84, %8 : vector<32x16xf32>
    %cst_46 = arith.constant dense<0.000000e+00> : vector<32x16xf32>
    %86 = tpu.matmul %0, %69, %cst_46 {dimension_numbers = #tpu.dot_dimension_numbers<[1], [0], [0], [1], [0, 0, 1, 1], [], []>} : vector<32x32xf32>, vector<32x16xf32>, vector<32x16xf32> -> vector<32x16xf32>
    %87 = arith.addf %86, %85 : vector<32x16xf32>
    %c4_i32 = arith.constant 4 : i32
    %c0_47 = arith.constant 0 : index
    %c0_48 = arith.constant 0 : index
    %88 = vector.load %arg9[%c0_47, %c0_48] : memref<32x16xf32, #tpu.memory_space<vmem>>, vector<32x16xf32>
    tpu.vector_store %arg9[%c0_47, %c0_48], %87 {strides = array<i32>} : memref<32x16xf32, #tpu.memory_space<vmem>>, vector<32x16xf32>,
    return
  }
  func.func @transform_0(%arg0: i32, %arg1: i32) -> (i32, i32, i32) {
    %c0_i32 = arith.constant 0 : i32
    %c0_i32_0 = arith.constant 0 : i32
    %c0_i32_1 = arith.constant 0 : i32
    return %arg0, %c0_i32, %c0_i32_0 : i32, i32, i32
  }
  func.func @transform_1(%arg0: i32, %arg1: i32) -> (i32, i32) {
    %c0_i32 = arith.constant 0 : i32
    %c0_i32_0 = arith.constant 0 : i32
    %c0_i32_1 = arith.constant 0 : i32
    return %c0_i32, %c0_i32_0 : i32, i32
  }
  func.func @transform_2(%arg0: i32, %arg1: i32) -> (i32, i32) {
    %c0_i32 = arith.constant 0 : i32
    %c0_i32_0 = arith.constant 0 : i32
    %c0_i32_1 = arith.constant 0 : i32
    return %c0_i32, %c0_i32_0 : i32, i32
  }
  func.func @transform_3(%arg0: i32, %arg1: i32) -> (i32, i32) {
    %c0_i32 = arith.constant 0 : i32
    %c0_i32_0 = arith.constant 0 : i32
    %c0_i32_1 = arith.constant 0 : i32
    return %c0_i32, %c0_i32_0 : i32, i32
  }
  func.func @transform_4(%arg0: i32, %arg1: i32) -> (i32, i32) {
    %c0_i32 = arith.constant 0 : i32
    %c0_i32_0 = arith.constant 0 : i32
    %c0_i32_1 = arith.constant 0 : i32
    return %c0_i32, %c0_i32_0 : i32, i32
  }
  func.func @transform_5(%arg0: i32, %arg1: i32) -> (i32, i32) {
    %c0_i32 = arith.constant 0 : i32
    %c0_i32_0 = arith.constant 0 : i32
    %c0_i32_1 = arith.constant 0 : i32
    return %c0_i32, %c0_i32_0 : i32, i32
  }
  func.func @transform_6(%arg0: i32, %arg1: i32) -> (i32, i32, i32, i32) {
    %c0_i32 = arith.constant 0 : i32
    %c0_i32_0 = arith.constant 0 : i32
    %c0_i32_1 = arith.constant 0 : i32
    return %arg0, %arg1, %c0_i32, %c0_i32_0 : i32, i32, i32, i32
  }
}

</mosaic_0001>

<llo_original>
// kernel: semi_parametric_forward.1
$region0: #{semi_parametric_forward.1}
  #allocation0 [shape = 'u32[]', space=smem, size = 0x4, offset = 0x4, fixed_abs, tag = 'smem constant byte address 0x4 - core index']
  #allocation1 [shape = 'u32[72,128]{1,0:T(1,128)}', space=vmem, size = 0x9000, scoped, tag = 'internal scratch']
  #allocation2 [shape = 'f32[32,16]{1,0:T(8,128)}', space=vmem, size = 0x4000, scoped, tag = 'scratch operand']
  #allocation5 [shape = 's32[]', space=sflag, size = 0x4, offset = 0, fixed_abs, tag = 'sflag constant byte address 0x0 - dummy sync flag']
  %s0 = inlined_call_operand.vmem [shape: f32[4,16,16], index: 0, kind: input, shape index: {}]
  %s1 = inlined_call_operand.vmem [shape: f32[32,32], index: 1, kind: input, shape index: {}]
  %s2 = inlined_call_operand.vmem [shape: f32[16,48], index: 2, kind: input, shape index: {}]
  %s3 = inlined_call_operand.vmem [shape: f32[1,48], index: 3, kind: input, shape index: {}]
  %s4 = inlined_call_operand.vmem [shape: f32[48,16], index: 4, kind: input, shape index: {}]
  %s5 = inlined_call_operand.vmem [shape: f32[1,16], index: 5, kind: input, shape index: {}]
  %s6 = inlined_call_operand.hbm [shape: f32[4,8,16,16], index: 6, kind: output, shape index: {}]
  %s7 = sld [smem:[#allocation0]]
  $region61: #{semi_parametric_forward.1} parent=0
    _
  %s9 = ssub.s32 1, %s7
  %s10 = scalar_select 0, %s9, %s7
  $region1: #{semi_parametric_forward.1} parent=0
    #allocation3 [shape = 'u8[131072]{0}', space=vmem, size = 0x20000, scoped, tag = 'output window, operand 0']
    #allocation4 [shape = 's32[2]{0}', space=sflag, size = 0x8, scoped, tag = 'scoped memory for semi_parametric_forward.1']
    %11 = vsyncpa [#allocation4], 0
    %s12 = scalar_lea.sflag [#allocation4], 1
    %13 = vsyncpa %s12, 0
    loop: start=0, step=1, limit=6
    $region2: #{semi_parametric_forward.1} parent=1 // loop_pre_header
      _
    $region3: #{semi_parametric_forward.1} parent=1 // loop_header
      %s15 = sphi 0, %s19
      %p16 = scmp.ge.s32.totalorder %s15, 6
      %s22 = sphi 0, %s34
      %s23 = sphi 0, %s30
      %s24 = sphi 0, %s22
      %s25 = sphi 0, %s23
      %s26 = sphi 0, %s24
      %s27 = sphi 0, %s25
      %s37 = sphi 0, %s39
      %s40 = sphi 0, %s37
      %s41 = sphi 0, %s40
      %s57 = sphi 0, %s41
      %s61 = sphi 0, %s61
      %s63 = sphi 0, %s61
      %s64 = sphi 0, %s63
      %s78 = sphi 0, %s64
      %s82 = sphi 0, %s82
      %s84 = sphi 0, %s82
      %s85 = sphi 0, %s84
      %s99 = sphi 0, %s85
      %s103 = sphi 0, %s103
      %s105 = sphi 0, %s103
      %s106 = sphi 0, %s105
      %s120 = sphi 0, %s106
      %s124 = sphi 0, %s124
      %s126 = sphi 0, %s124
      %s127 = sphi 0, %s126
      %s141 = sphi 0, %s127
      %s145 = sphi 0, %s145
      %s147 = sphi 0, %s145
      %s148 = sphi 0, %s147
      %s162 = sphi 0, %s148
      %s170 = sphi 0, %s172
      %s173 = sphi 0, %s170
      %s174 = sphi 0, %s173
      %s190 = sphi 0, %s174
    $region4: #{semi_parametric_forward.1} parent=1 // loop_header_branch
      %18 = sbr.rel (%p16) target = $region8
    $region5: #{semi_parametric_forward.1} parent=1 // loop_body
      %s20 = ssub.s32 %s15, 1
      %s21 = ssub.s32 %s15, 2
      %s28 = sadd.s32 1, %s23
      %p29 = scmp.ge.s32.totalorder %s28, 2
      %s30 = scalar_select %p29, 0, %s28
      %s31 = sadd.s32 1, %s22
      %s32 = scalar_select %p29, %s31, %s22
      %p33 = scmp.ge.s32.totalorder %s32, 2
      %s34 = scalar_select %p33, 0, %s32
      %s35 = ssub.s32 %s22, %s34
      %p36 = scmp.eq.s32.totalorder %s35, 0
      %s38 = sadd.s32 %s37, 1
      %s39 = scalar_select %p36, %s37, %s38
      %p42 = pneg %p36
      %p43 = scmp.eq.s32.totalorder %s15, 3
      %p44 = por %p42, %p43
      %p45 = scmp.ne.s32.totalorder %s37, %s40
      %p46 = scmp.eq.s32.totalorder %s15, 0
      %p47 = por %p45, %p46
      %p48 = scmp.ne.s32.totalorder %s37, %s40
      %p49 = scmp.eq.s32.totalorder %s20, 3
      %p50 = por %p48, %p49
      %p51 = scmp.ne.s32.totalorder %s40, %s41
      %p52 = scmp.eq.s32.totalorder %s20, 0
      %p53 = por %p51, %p52
      %p54 = scmp.ne.s32.totalorder %s40, %s41
      %p55 = scmp.eq.s32.totalorder %s21, 3
      %p56 = por %p54, %p55
      %p58 = scmp.ne.s32.totalorder %s41, %s57
      %p59 = scmp.eq.s32.totalorder %s21, 0
      %p60 = por %p58, %p59
      %s62 = sadd.s32 %s61, 1
      %p65 = scmp.eq.s32.totalorder %s15, 3
      %p66 = scmp.ne.s32.totalorder %s61, %s63
      %p67 = scmp.eq.s32.totalorder %s15, 0
      %p68 = por %p66, %p67
      %p69 = scmp.ne.s32.totalorder %s61, %s63
      %p70 = scmp.eq.s32.totalorder %s20, 3
      %p71 = por %p69, %p70
      %p72 = scmp.ne.s32.totalorder %s63, %s64
      %p73 = scmp.eq.s32.totalorder %s20, 0
      %p74 = por %p72, %p73
      %p75 = scmp.ne.s32.totalorder %s63, %s64
      %p76 = scmp.eq.s32.totalorder %s21, 3
      %p77 = por %p75, %p76
      %p79 = scmp.ne.s32.totalorder %s64, %s78
      %p80 = scmp.eq.s32.totalorder %s21, 0
      %p81 = por %p79, %p80
      %s83 = sadd.s32 %s82, 1
      %p86 = scmp.eq.s32.totalorder %s15, 3
      %p87 = scmp.ne.s32.totalorder %s82, %s84
      %p88 = scmp.eq.s32.totalorder %s15, 0
      %p89 = por %p87, %p88
      %p90 = scmp.ne.s32.totalorder %s82, %s84
      %p91 = scmp.eq.s32.totalorder %s20, 3
      %p92 = por %p90, %p91
      %p93 = scmp.ne.s32.totalorder %s84, %s85
      %p94 = scmp.eq.s32.totalorder %s20, 0
      %p95 = por %p93, %p94
      %p96 = scmp.ne.s32.totalorder %s84, %s85
      %p97 = scmp.eq.s32.totalorder %s21, 3
      %p98 = por %p96, %p97
      %p100 = scmp.ne.s32.totalorder %s85, %s99
      %p101 = scmp.eq.s32.totalorder %s21, 0
      %p102 = por %p100, %p101
      %s104 = sadd.s32 %s103, 1
      %p107 = scmp.eq.s32.totalorder %s15, 3
      %p108 = scmp.ne.s32.totalorder %s103, %s105
      %p109 = scmp.eq.s32.totalorder %s15, 0
      %p110 = por %p108, %p109
      %p111 = scmp.ne.s32.totalorder %s103, %s105
      %p112 = scmp.eq.s32.totalorder %s20, 3
      %p113 = por %p111, %p112
      %p114 = scmp.ne.s32.totalorder %s105, %s106
      %p115 = scmp.eq.s32.totalorder %s20, 0
      %p116 = por %p114, %p115
      %p117 = scmp.ne.s32.totalorder %s105, %s106
      %p118 = scmp.eq.s32.totalorder %s21, 3
      %p119 = por %p117, %p118
      %p121 = scmp.ne.s32.totalorder %s106, %s120
      %p122 = scmp.eq.s32.totalorder %s21, 0
      %p123 = por %p121, %p122
      %s125 = sadd.s32 %s124, 1
      %p128 = scmp.eq.s32.totalorder %s15, 3
      %p129 = scmp.ne.s32.totalorder %s124, %s126
      %p130 = scmp.eq.s32.totalorder %s15, 0
      %p131 = por %p129, %p130
      %p132 = scmp.ne.s32.totalorder %s124, %s126
      %p133 = scmp.eq.s32.totalorder %s20, 3
      %p134 = por %p132, %p133
      %p135 = scmp.ne.s32.totalorder %s126, %s127
      %p136 = scmp.eq.s32.totalorder %s20, 0
      %p137 = por %p135, %p136
      %p138 = scmp.ne.s32.totalorder %s126, %s127
      %p139 = scmp.eq.s32.totalorder %s21, 3
      %p140 = por %p138, %p139
      %p142 = scmp.ne.s32.totalorder %s127, %s141
      %p143 = scmp.eq.s32.totalorder %s21, 0
      %p144 = por %p142, %p143
      %s146 = sadd.s32 %s145, 1
      %p149 = scmp.eq.s32.totalorder %s15, 3
      %p150 = scmp.ne.s32.totalorder %s145, %s147
      %p151 = scmp.eq.s32.totalorder %s15, 0
      %p152 = por %p150, %p151
      %p153 = scmp.ne.s32.totalorder %s145, %s147
      %p154 = scmp.eq.s32.totalorder %s20, 3
      %p155 = por %p153, %p154
      %p156 = scmp.ne.s32.totalorder %s147, %s148
      %p157 = scmp.eq.s32.totalorder %s20, 0
      %p158 = por %p156, %p157
      %p159 = scmp.ne.s32.totalorder %s147, %s148
      %p160 = scmp.eq.s32.totalorder %s21, 3
      %p161 = por %p159, %p160
      %p163 = scmp.ne.s32.totalorder %s148, %s162
      %p164 = scmp.eq.s32.totalorder %s21, 0
      %p165 = por %p163, %p164
      %s166 = ssub.s32 %s22, %s34
      %s167 = ssub.s32 %s23, %s30
      %s168 = sor.u32 %s166, %s167
      %p169 = scmp.eq.s32.totalorder %s168, 0
      %s171 = sadd.s32 %s170, 1
      %s172 = scalar_select %p169, %s170, %s171
      %p175 = pneg %p169
      %p176 = scmp.eq.s32.totalorder %s15, 3
      %p177 = por %p175, %p176
      %p178 = scmp.ne.s32.totalorder %s170, %s173
      %p179 = scmp.eq.s32.totalorder %s15, 0
      %p180 = por %p178, %p179
      %p181 = scmp.ne.s32.totalorder %s170, %s173
      %p182 = scmp.eq.s32.totalorder %s20, 3
      %p183 = por %p181, %p182
      %p184 = scmp.ne.s32.totalorder %s173, %s174
      %p185 = scmp.eq.s32.totalorder %s20, 0
      %p186 = por %p184, %p185
      %p187 = scmp.ne.s32.totalorder %s173, %s174
      %p188 = scmp.eq.s32.totalorder %s21, 3
      %p189 = por %p187, %p188
      %p191 = scmp.ne.s32.totalorder %s174, %s190
      %p192 = scmp.eq.s32.totalorder %s21, 0
      %p193 = por %p191, %p192
      %p194 = scmp.le.s32.totalorder 1, %s15
      %p195 = scmp.lt.s32.totalorder %s15, 5
      %p196 = pnand %p194, %p195
      %p197 = pneg %p196
      // Predicated region
      $region9: #{semi_parametric_forward.1} parent=5 // pred_check
        _
      $region10: #{semi_parametric_forward.1} parent=5 // pred_check_branch
        %199 = sbr.rel (%p196) target = $region12
      $region11: #{semi_parametric_forward.1} parent=5 // pred_region
        %s200 = ssub.s32 %s15, 1
        // Predicated region
        $region13: #{semi_parametric_forward.1} parent=11 // pred_check
          %p201 = pneg %p74
        $region14: #{semi_parametric_forward.1} parent=11 // pred_check_branch
          %203 = sbr.rel (%p201) target = $region16
        $region15: #{semi_parametric_forward.1} parent=11 // pred_region
          _
        $region16: #{semi_parametric_forward.1} parent=11 // pred_fallthru
          _
        // Predicated region
        $region17: #{semi_parametric_forward.1} parent=11 // pred_check
          %p204 = pneg %p95
        $region18: #{semi_parametric_forward.1} parent=11 // pred_check_branch
          %206 = sbr.rel (%p204) target = $region20
        $region19: #{semi_parametric_forward.1} parent=11 // pred_region
          _
        $region20: #{semi_parametric_forward.1} parent=11 // pred_fallthru
          _
        // Predicated region
        $region21: #{semi_parametric_forward.1} parent=11 // pred_check
          %p207 = pneg %p116
        $region22: #{semi_parametric_forward.1} parent=11 // pred_check_branch
          %209 = sbr.rel (%p207) target = $region24
        $region23: #{semi_parametric_forward.1} parent=11 // pred_region
          _
        $region24: #{semi_parametric_forward.1} parent=11 // pred_fallthru
          _
        // Predicated region
        $region25: #{semi_parametric_forward.1} parent=11 // pred_check
          %p210 = pneg %p137
        $region26: #{semi_parametric_forward.1} parent=11 // pred_check_branch
          %212 = sbr.rel (%p210) target = $region28
        $region27: #{semi_parametric_forward.1} parent=11 // pred_region
          _
        $region28: #{semi_parametric_forward.1} parent=11 // pred_fallthru
          _
        // Predicated region
        $region29: #{semi_parametric_forward.1} parent=11 // pred_check
          %p213 = pneg %p158
        $region30: #{semi_parametric_forward.1} parent=11 // pred_check_branch
          %215 = sbr.rel (%p213) target = $region32
        $region31: #{semi_parametric_forward.1} parent=11 // pred_region
          _
        $region32: #{semi_parametric_forward.1} parent=11 // pred_fallthru
          _
      $region12: #{semi_parametric_forward.1} parent=5 // pred_fallthru
        _
      %p216 = scmp.lt.s32.totalorder %s15, 4
      // Predicated region
      $region33: #{semi_parametric_forward.1} parent=5 // pred_check
        %p217 = pneg %p216
      $region34: #{semi_parametric_forward.1} parent=5 // pred_check_branch
        %219 = sbr.rel (%p217) target = $region36
      $region35: #{semi_parametric_forward.1} parent=5 // pred_region
        // Predicated region
        $region37: #{semi_parametric_forward.1} parent=35 // pred_check
          %p220 = pneg %p47
        $region38: #{semi_parametric_forward.1} parent=35 // pred_check_branch
          %222 = sbr.rel (%p220) target = $region40
        $region39: #{semi_parametric_forward.1} parent=35 // pred_region
          %s223 = smul.u32 2, %s22
          %p224 = scmp.lt.s32.totalorder %s223, 3
          %s225 = scalar_select %p224, %s223, 3
          %s226 = smul.addr %s225, 2
          %s227 = smul.addr %s226, 8
          %s228 = scalar_lea.vmem %s0, %s227
          %s229 = smul.u32 2, %s22
        $region40: #{semi_parametric_forward.1} parent=35 // pred_fallthru
          _
      $region36: #{semi_parametric_forward.1} parent=5 // pred_fallthru
        _
      %p230 = scmp.le.s32.totalorder 1, %s15
      %p231 = scmp.lt.s32.totalorder %s15, 5
      %p232 = pnand %p230, %p231
      %p233 = pneg %p232
      // Predicated region
      $region41: #{semi_parametric_forward.1} parent=5 // pred_check
        _
      $region42: #{semi_parametric_forward.1} parent=5 // pred_check_branch
        %235 = sbr.rel (%p232) target = $region44
      $region43: #{semi_parametric_forward.1} parent=5 // pred_region
        %s236 = ssub.s32 %s15, 1
        %s237 = smul.u32 2, %s24
        %p238 = scmp.lt.s32.totalorder %s237, 3
        %s239 = scalar_select %p238, %s237, 3
        %s240 = smul.addr %s239, 2
        %s241 = smul.addr %s240, 8
        %s242 = scalar_lea.vmem %s0, %s241
        %p243 = pneg %p53
        %p244 = pneg %p50
        %p245 = pneg %p74
        %p246 = pneg %p71
        %p247 = pneg %p95
        %p248 = pneg %p92
        %p249 = pneg %p116
        %p250 = pneg %p113
        %p251 = pneg %p137
        %p252 = pneg %p134
        %p253 = pneg %p158
        %p254 = pneg %p155
        %p255 = pneg %p186
        %p256 = pneg %p183
        %s257 = sand.u32 %s173, 1
        %s258 = scalar_lea.sflag [#allocation4], %s257
        %s259 = sand.u32 %s173, 1
        %s260 = smul.addr %s259, 128
        %s261 = scalar_lea.vmem [#allocation3], %s260
        %s262 = smul.u32 2, %s24
        %p263 = scmp.lt.s32.totalorder %s262, 3
        %s264 = scalar_select %p263, %s262, 3
        %s265 = smul.addr %s264, 2
        %s266 = smul.addr %s265, 8
        %s267 = scalar_lea.vmem %s0, %s266
        %s268 = smul.u32 2, %s24
        %s269 = smul.u32 2, %s24
        %s270 = smul.u32 4, %s25
        %v271 = vld [vmem:[%s1] sm:$0xff]
        %v272 = vld [vmem:[%s1 + $0x8] sm:$0xff]
        %v273 = vld [vmem:[%s1 + $0x10] sm:$0xff]
        %v274 = vld [vmem:[%s1 + $0x18] sm:$0xff]
        %v275 = vld [vmem:[%s2] sm:$0xff]
        %v276 = vld [vmem:[%s2 + $0x8] sm:$0xff]
        %v277 = vld [vmem:[%s4] sm:$0xff]
        %v278 = vld [vmem:[%s4 + $0x8] sm:$0xff]
        %v279 = vld [vmem:[%s4 + $0x10] sm:$0xff]
        %v280 = vld [vmem:[%s4 + $0x18] sm:$0xff]
        %v281 = vld [vmem:[%s4 + $0x20] sm:$0xff]
        %v282 = vld [vmem:[%s4 + $0x28] sm:$0xff]
        %v283 = vld [vmem:[%s3] sm:$0x1]
        %v285 = vperm.slane %v283, 0
        %v287 = vld [vmem:[%s5] sm:$0x1]
        %v289 = vperm.slane %v287, 0
        %v291 = vlaneseq
        %v292 = vand.u32 %v291, 127
        %vm293 = vcmp.lt.s32.totalorder %v292, 32
        %p294 = scmp.eq.s32.totalorder %s25, 0
        // Predicated region
        $region45: #{semi_parametric_forward.1} parent=43 // pred_check
          %p295 = pneg %p294
        $region46: #{semi_parametric_forward.1} parent=43 // pred_check_branch
          %297 = sbr.rel (%p295) target = $region48
        $region47: #{semi_parametric_forward.1} parent=43 // pred_region
          %v298 = vld [vmem:[%s267] sm:$0xff]
          %v299 = vld [vmem:[%s267 + $0x8] sm:$0xff]
          %vm300 = vcmask 130048
          %301 = vst.msk [vmem:[#allocation2] sm:$0xff] %vm300, %v298
          %302 = vst.msk [vmem:[#allocation2 + $0x8] sm:$0xff] %vm300, %v299
          %s303 = scalar_lea.vmem %s267, 16
          %v304 = vld [vmem:[%s303] sm:$0xff]
          %v305 = vld [vmem:[%s303 + $0x8] sm:$0xff]
          %306 = vst.msk [vmem:[#allocation2 + $0x10] sm:$0xff] %vm300, %v304
          %307 = vst.msk [vmem:[#allocation2 + $0x18] sm:$0xff] %vm300, %v305
        $region48: #{semi_parametric_forward.1} parent=43 // pred_fallthru
          _
        %v308 = vld [vmem:[#allocation2] sm:$0xff]
        %v309 = vld [vmem:[#allocation2 + $0x8] sm:$0xff]
        %v310 = vld [vmem:[#allocation2 + $0x10] sm:$0xff]
        %v311 = vld [vmem:[#allocation2 + $0x18] sm:$0xff]
        %vm312 = vcmask 130048
        %313 = vst.msk [vmem:[%s261] sm:$0xff] %vm312, %v308
        %314 = vst.msk [vmem:[%s261 + $0x8] sm:$0xff] %vm312, %v309
        %s315 = scalar_lea.vmem %s261, 64 [#allocation3]
        %316 = vst.msk [vmem:[%s315] sm:$0xff] %vm312, %v310
        %317 = vst.msk [vmem:[%s315 + $0x8] sm:$0xff] %vm312, %v311
        %v319 = vsel %vm312, %v308, 0
        %v322 = vsel %vm312, %v309, 0
        %v325 = vsel %vm312, %v310, 0
        %v328 = vsel %vm312, %v311, 0
        %330 = vmatpush.msra.mxu0 0.0
        %331 = vmatpush.msra.mxu0 0.0
        %332 = vmatpush.msra.mxu0 0.0
        %333 = vmatpush.msra.mxu0 0.0
        %334 = vmatpush.msra.mxu0 0.0
        %335 = vmatpush.msra.mxu0 0.0
        %336 = vmatpush.msra.mxu0 0.0
        %337 = vmatpush.msra.mxu0 0.0
        %338 = vmatpush.msra.mxu0 0.0
        %339 = vmatpush.msra.mxu0 0.0
        %340 = vmatpush.msra.mxu0 0.0
        %341 = vmatpush.msra.mxu0 0.0
        %342 = vmatpush.msra.mxu0 0.0
        %343 = vmatpush.msra.mxu0 0.0
        %344 = vmatpush.msra.mxu0 %v276
        %345 = vmatpush.msra.mxu0 %v275
        %346 = vmatmul.f32.gmra.mxu0 %v319
        %v347 = vpop.f32.mrf.mxu0
        %v348 = vadd.f32 %v285, %v347
        %349 = vmatmul.f32.gmra.mxu0 %v322
        %v350 = vpop.f32.mrf.mxu0
        %v351 = vadd.f32 %v285, %v350
        %352 = vmatmul.f32.gmra.mxu0 %v325
        %v353 = vpop.f32.mrf.mxu0
        %v354 = vadd.f32 %v285, %v353
        %355 = vmatmul.f32.gmra.mxu0 %v328
        %v356 = vpop.f32.mrf.mxu0
        %v357 = vadd.f32 %v285, %v356
        %358 = vdwg.mxu0
        %v359 = vtanh.pop %v348
        %v360 = vtanh.pop %v351
        %v361 = vtanh.pop %v354
        %v362 = vtanh.pop %v357
        %v363 = vsel %vm293, %v359, %v348
        %v364 = vsel %vm293, %v360, %v351
        %v365 = vsel %vm293, %v361, %v354
        %v366 = vsel %vm293, %v362, %v357
        %vm367 = vcmask 392192
        %v369 = vsel %vm367, %v363, 0
        %v372 = vsel %vm367, %v364, 0
        %v375 = vsel %vm367, %v365, 0
        %v378 = vsel %vm367, %v366, 0
        %380 = vmatpush.msra.mxu0 0.0
        %381 = vmatpush.msra.mxu0 0.0
        %382 = vmatpush.msra.mxu0 0.0
        %383 = vmatpush.msra.mxu0 0.0
        %384 = vmatpush.msra.mxu0 0.0
        %385 = vmatpush.msra.mxu0 0.0
        %386 = vmatpush.msra.mxu0 0.0
        %387 = vmatpush.msra.mxu0 0.0
        %388 = vmatpush.msra.mxu0 0.0
        %389 = vmatpush.msra.mxu0 0.0
        %390 = vmatpush.msra.mxu0 %v282
        %391 = vmatpush.msra.mxu0 %v281
        %392 = vmatpush.msra.mxu0 %v280
        %393 = vmatpush.msra.mxu0 %v279
        %394 = vmatpush.msra.mxu0 %v278
        %395 = vmatpush.msra.mxu0 %v277
        %396 = vmatmul.f32.gmra.mxu0 %v369
        %v397 = vpop.f32.mrf.mxu0
        %v398 = vadd.f32 %v289, %v397
        %399 = vmatmul.f32.gmra.mxu0 %v372
        %v400 = vpop.f32.mrf.mxu0
        %v401 = vadd.f32 %v289, %v400
        %402 = vmatmul.f32.gmra.mxu0 %v375
        %v403 = vpop.f32.mrf.mxu0
        %v404 = vadd.f32 %v289, %v403
        %405 = vmatmul.f32.gmra.mxu0 %v378
        %v406 = vpop.f32.mrf.mxu0
        %v407 = vadd.f32 %v289, %v406
        %408 = vdwg.mxu0
        %vm409 = vcmask 261120
        %v411 = vsel %vm409, %v271, 0
        %v414 = vsel %vm409, %v272, 0
        %v417 = vsel %vm409, %v273, 0
        %v420 = vsel %vm409, %v274, 0
        %422 = vmatpush.msra.mxu0 0.0
        %423 = vmatpush.msra.mxu0 0.0
        %424 = vmatpush.msra.mxu0 0.0
        %425 = vmatpush.msra.mxu0 0.0
        %426 = vmatpush.msra.mxu0 0.0
        %427 = vmatpush.msra.mxu0 0.0
        %428 = vmatpush.msra.mxu0 0.0
        %429 = vmatpush.msra.mxu0 0.0
        %430 = vmatpush.msra.mxu0 0.0
        %431 = vmatpush.msra.mxu0 0.0
        %432 = vmatpush.msra.mxu0 0.0
        %433 = vmatpush.msra.mxu0 0.0
        %434 = vmatpush.msra.mxu0 %v311
        %435 = vmatpush.msra.mxu0 %v310
        %436 = vmatpush.msra.mxu0 %v309
        %437 = vmatpush.msra.mxu0 %v308
        %438 = vmatmul.f32.gmra.mxu0 %v411
        %v439 = vpop.f32.mrf.mxu0
        %v440 = vadd.f32 %v398, %v439
        %441 = vmatmul.f32.gmra.mxu0 %v414
        %v442 = vpop.f32.mrf.mxu0
        %v443 = vadd.f32 %v401, %v442
        %444 = vmatmul.f32.gmra.mxu0 %v417
        %v445 = vpop.f32.mrf.mxu0
        %v446 = vadd.f32 %v404, %v445
        %447 = vmatmul.f32.gmra.mxu0 %v420
        %v448 = vpop.f32.mrf.mxu0
        %v449 = vadd.f32 %v407, %v448
        %450 = vdwg.mxu0
        %s451 = scalar_lea.vmem %s261, 16 [#allocation3]
        %452 = vst.msk [vmem:[%s451] sm:$0xff] %vm312, %v440
        %453 = vst.msk [vmem:[%s451 + $0x8] sm:$0xff] %vm312, %v443
        %s454 = scalar_lea.vmem %s261, 80 [#allocation3]
        %455 = vst.msk [vmem:[%s454] sm:$0xff] %vm312, %v446
        %456 = vst.msk [vmem:[%s454 + $0x8] sm:$0xff] %vm312, %v449
        %v458 = vsel %vm312, %v440, 0
        %v461 = vsel %vm312, %v443, 0
        %v464 = vsel %vm312, %v446, 0
        %v467 = vsel %vm312, %v449, 0
        %469 = vmatpush.msra.mxu0 0.0
        %470 = vmatpush.msra.mxu0 0.0
        %471 = vmatpush.msra.mxu0 0.0
        %472 = vmatpush.msra.mxu0 0.0
        %473 = vmatpush.msra.mxu0 0.0
        %474 = vmatpush.msra.mxu0 0.0
        %475 = vmatpush.msra.mxu0 0.0
        %476 = vmatpush.msra.mxu0 0.0
        %477 = vmatpush.msra.mxu0 0.0
        %478 = vmatpush.msra.mxu0 0.0
        %479 = vmatpush.msra.mxu0 0.0
        %480 = vmatpush.msra.mxu0 0.0
        %481 = vmatpush.msra.mxu0 0.0
        %482 = vmatpush.msra.mxu0 0.0
        %483 = vmatpush.msra.mxu0 %v276
        %484 = vmatpush.msra.mxu0 %v275
        %485 = vmatmul.f32.gmra.mxu0 %v458
        %v486 = vpop.f32.mrf.mxu0
        %v487 = vadd.f32 %v285, %v486
        %488 = vmatmul.f32.gmra.mxu0 %v461
        %v489 = vpop.f32.mrf.mxu0
        %v490 = vadd.f32 %v285, %v489
        %491 = vmatmul.f32.gmra.mxu0 %v464
        %v492 = vpop.f32.mrf.mxu0
        %v493 = vadd.f32 %v285, %v492
        %494 = vmatmul.f32.gmra.mxu0 %v467
        %v495 = vpop.f32.mrf.mxu0
        %v496 = vadd.f32 %v285, %v495
        %497 = vdwg.mxu0
        %v498 = vtanh.pop %v487
        %v499 = vtanh.pop %v490
        %v500 = vtanh.pop %v493
        %v501 = vtanh.pop %v496
        %v502 = vsel %vm293, %v498, %v487
        %v503 = vsel %vm293, %v499, %v490
        %v504 = vsel %vm293, %v500, %v493
        %v505 = vsel %vm293, %v501, %v496
        %v507 = vsel %vm367, %v502, 0
        %v510 = vsel %vm367, %v503, 0
        %v513 = vsel %vm367, %v504, 0
        %v516 = vsel %vm367, %v505, 0
        %518 = vmatpush.msra.mxu0 0.0
        %519 = vmatpush.msra.mxu0 0.0
        %520 = vmatpush.msra.mxu0 0.0
        %521 = vmatpush.msra.mxu0 0.0
        %522 = vmatpush.msra.mxu0 0.0
        %523 = vmatpush.msra.mxu0 0.0
        %524 = vmatpush.msra.mxu0 0.0
        %525 = vmatpush.msra.mxu0 0.0
        %526 = vmatpush.msra.mxu0 0.0
        %527 = vmatpush.msra.mxu0 0.0
        %528 = vmatpush.msra.mxu0 %v282
        %529 = vmatpush.msra.mxu0 %v281
        %530 = vmatpush.msra.mxu0 %v280
        %531 = vmatpush.msra.mxu0 %v279
        %532 = vmatpush.msra.mxu0 %v278
        %533 = vmatpush.msra.mxu0 %v277
        %534 = vmatmul.f32.gmra.mxu0 %v507
        %v535 = vpop.f32.mrf.mxu0
        %v536 = vadd.f32 %v289, %v535
        %537 = vmatmul.f32.gmra.mxu0 %v510
        %v538 = vpop.f32.mrf.mxu0
        %v539 = vadd.f32 %v289, %v538
        %540 = vmatmul.f32.gmra.mxu0 %v513
        %v541 = vpop.f32.mrf.mxu0
        %v542 = vadd.f32 %v289, %v541
        %543 = vmatmul.f32.gmra.mxu0 %v516
        %v544 = vpop.f32.mrf.mxu0
        %v545 = vadd.f32 %v289, %v544
        %546 = vdwg.mxu0
        %547 = vmatpush.msra.mxu0 0.0
        %548 = vmatpush.msra.mxu0 0.0
        %549 = vmatpush.msra.mxu0 0.0
        %550 = vmatpush.msra.mxu0 0.0
        %551 = vmatpush.msra.mxu0 0.0
        %552 = vmatpush.msra.mxu0 0.0
        %553 = vmatpush.msra.mxu0 0.0
        %554 = vmatpush.msra.mxu0 0.0
        %555 = vmatpush.msra.mxu0 0.0
        %556 = vmatpush.msra.mxu0 0.0
        %557 = vmatpush.msra.mxu0 0.0
        %558 = vmatpush.msra.mxu0 0.0
        %559 = vmatpush.msra.mxu0 %v449
        %560 = vmatpush.msra.mxu0 %v446
        %561 = vmatpush.msra.mxu0 %v443
        %562 = vmatpush.msra.mxu0 %v440
        %563 = vmatmul.f32.gmra.mxu0 %v411
        %v564 = vpop.f32.mrf.mxu0
        %v565 = vadd.f32 %v536, %v564
        %566 = vmatmul.f32.gmra.mxu0 %v414
        %v567 = vpop.f32.mrf.mxu0
        %v568 = vadd.f32 %v539, %v567
        %569 = vmatmul.f32.gmra.mxu0 %v417
        %v570 = vpop.f32.mrf.mxu0
        %v571 = vadd.f32 %v542, %v570
        %572 = vmatmul.f32.gmra.mxu0 %v420
        %v573 = vpop.f32.mrf.mxu0
        %v574 = vadd.f32 %v545, %v573
        %575 = vdwg.mxu0
        %s576 = scalar_lea.vmem %s261, 32 [#allocation3]
        %577 = vst.msk [vmem:[%s576] sm:$0xff] %vm312, %v565
        %578 = vst.msk [vmem:[%s576 + $0x8] sm:$0xff] %vm312, %v568
        %s579 = scalar_lea.vmem %s261, 96 [#allocation3]
        %580 = vst.msk [vmem:[%s579] sm:$0xff] %vm312, %v571
        %581 = vst.msk [vmem:[%s579 + $0x8] sm:$0xff] %vm312, %v574
        %v583 = vsel %vm312, %v565, 0
        %v586 = vsel %vm312, %v568, 0
        %v589 = vsel %vm312, %v571, 0
        %v592 = vsel %vm312, %v574, 0
        %594 = vmatpush.msra.mxu0 0.0
        %595 = vmatpush.msra.mxu0 0.0
        %596 = vmatpush.msra.mxu0 0.0
        %597 = vmatpush.msra.mxu0 0.0
        %598 = vmatpush.msra.mxu0 0.0
        %599 = vmatpush.msra.mxu0 0.0
        %600 = vmatpush.msra.mxu0 0.0
        %601 = vmatpush.msra.mxu0 0.0
        %602 = vmatpush.msra.mxu0 0.0
        %603 = vmatpush.msra.mxu0 0.0
        %604 = vmatpush.msra.mxu0 0.0
        %605 = vmatpush.msra.mxu0 0.0
        %606 = vmatpush.msra.mxu0 0.0
        %607 = vmatpush.msra.mxu0 0.0
        %608 = vmatpush.msra.mxu0 %v276
        %609 = vmatpush.msra.mxu0 %v275
        %610 = vmatmul.f32.gmra.mxu0 %v583
        %v611 = vpop.f32.mrf.mxu0
        %v612 = vadd.f32 %v285, %v611
        %613 = vmatmul.f32.gmra.mxu0 %v586
        %v614 = vpop.f32.mrf.mxu0
        %v615 = vadd.f32 %v285, %v614
        %616 = vmatmul.f32.gmra.mxu0 %v589
        %v617 = vpop.f32.mrf.mxu0
        %v618 = vadd.f32 %v285, %v617
        %619 = vmatmul.f32.gmra.mxu0 %v592
        %v620 = vpop.f32.mrf.mxu0
        %v621 = vadd.f32 %v285, %v620
        %622 = vdwg.mxu0
        %v623 = vtanh.pop %v612
        %v624 = vtanh.pop %v615
        %v625 = vtanh.pop %v618
        %v626 = vtanh.pop %v621
        %v627 = vsel %vm293, %v623, %v612
        %v628 = vsel %vm293, %v624, %v615
        %v629 = vsel %vm293, %v625, %v618
        %v630 = vsel %vm293, %v626, %v621
        %v632 = vsel %vm367, %v627, 0
        %v635 = vsel %vm367, %v628, 0
        %v638 = vsel %vm367, %v629, 0
        %v641 = vsel %vm367, %v630, 0
        %643 = vmatpush.msra.mxu0 0.0
        %644 = vmatpush.msra.mxu0 0.0
        %645 = vmatpush.msra.mxu0 0.0
        %646 = vmatpush.msra.mxu0 0.0
        %647 = vmatpush.msra.mxu0 0.0
        %648 = vmatpush.msra.mxu0 0.0
        %649 = vmatpush.msra.mxu0 0.0
        %650 = vmatpush.msra.mxu0 0.0
        %651 = vmatpush.msra.mxu0 0.0
        %652 = vmatpush.msra.mxu0 0.0
        %653 = vmatpush.msra.mxu0 %v282
        %654 = vmatpush.msra.mxu0 %v281
        %655 = vmatpush.msra.mxu0 %v280
        %656 = vmatpush.msra.mxu0 %v279
        %657 = vmatpush.msra.mxu0 %v278
        %658 = vmatpush.msra.mxu0 %v277
        %659 = vmatmul.f32.gmra.mxu0 %v632
        %v660 = vpop.f32.mrf.mxu0
        %v661 = vadd.f32 %v289, %v660
        %662 = vmatmul.f32.gmra.mxu0 %v635
        %v663 = vpop.f32.mrf.mxu0
        %v664 = vadd.f32 %v289, %v663
        %665 = vmatmul.f32.gmra.mxu0 %v638
        %v666 = vpop.f32.mrf.mxu0
        %v667 = vadd.f32 %v289, %v666
        %668 = vmatmul.f32.gmra.mxu0 %v641
        %v669 = vpop.f32.mrf.mxu0
        %v670 = vadd.f32 %v289, %v669
        %671 = vdwg.mxu0
        %672 = vmatpush.msra.mxu0 0.0
        %673 = vmatpush.msra.mxu0 0.0
        %674 = vmatpush.msra.mxu0 0.0
        %675 = vmatpush.msra.mxu0 0.0
        %676 = vmatpush.msra.mxu0 0.0
        %677 = vmatpush.msra.mxu0 0.0
        %678 = vmatpush.msra.mxu0 0.0
        %679 = vmatpush.msra.mxu0 0.0
        %680 = vmatpush.msra.mxu0 0.0
        %681 = vmatpush.msra.mxu0 0.0
        %682 = vmatpush.msra.mxu0 0.0
        %683 = vmatpush.msra.mxu0 0.0
        %684 = vmatpush.msra.mxu0 %v574
        %685 = vmatpush.msra.mxu0 %v571
        %686 = vmatpush.msra.mxu0 %v568
        %687 = vmatpush.msra.mxu0 %v565
        %688 = vmatmul.f32.gmra.mxu0 %v411
        %v689 = vpop.f32.mrf.mxu0
        %v690 = vadd.f32 %v661, %v689
        %691 = vmatmul.f32.gmra.mxu0 %v414
        %v692 = vpop.f32.mrf.mxu0
        %v693 = vadd.f32 %v664, %v692
        %694 = vmatmul.f32.gmra.mxu0 %v417
        %v695 = vpop.f32.mrf.mxu0
        %v696 = vadd.f32 %v667, %v695
        %697 = vmatmul.f32.gmra.mxu0 %v420
        %v698 = vpop.f32.mrf.mxu0
        %v699 = vadd.f32 %v670, %v698
        %700 = vdwg.mxu0
        %s701 = scalar_lea.vmem %s261, 48 [#allocation3]
        %702 = vst.msk [vmem:[%s701] sm:$0xff] %vm312, %v690
        %703 = vst.msk [vmem:[%s701 + $0x8] sm:$0xff] %vm312, %v693
        %s704 = scalar_lea.vmem %s261, 112 [#allocation3]
        %705 = vst.msk [vmem:[%s704] sm:$0xff] %vm312, %v696
        %706 = vst.msk [vmem:[%s704 + $0x8] sm:$0xff] %vm312, %v699
        %v708 = vsel %vm312, %v690, 0
        %v711 = vsel %vm312, %v693, 0
        %v714 = vsel %vm312, %v696, 0
        %v717 = vsel %vm312, %v699, 0
        %719 = vmatpush.msra.mxu0 0.0
        %720 = vmatpush.msra.mxu0 0.0
        %721 = vmatpush.msra.mxu0 0.0
        %722 = vmatpush.msra.mxu0 0.0
        %723 = vmatpush.msra.mxu0 0.0
        %724 = vmatpush.msra.mxu0 0.0
        %725 = vmatpush.msra.mxu0 0.0
        %726 = vmatpush.msra.mxu0 0.0
        %727 = vmatpush.msra.mxu0 0.0
        %728 = vmatpush.msra.mxu0 0.0
        %729 = vmatpush.msra.mxu0 0.0
        %730 = vmatpush.msra.mxu0 0.0
        %731 = vmatpush.msra.mxu0 0.0
        %732 = vmatpush.msra.mxu0 0.0
        %733 = vmatpush.msra.mxu0 %v276
        %734 = vmatpush.msra.mxu0 %v275
        %735 = vmatmul.f32.gmra.mxu0 %v708
        %v736 = vpop.f32.mrf.mxu0
        %v737 = vadd.f32 %v285, %v736
        %738 = vmatmul.f32.gmra.mxu0 %v711
        %v739 = vpop.f32.mrf.mxu0
        %v740 = vadd.f32 %v285, %v739
        %741 = vmatmul.f32.gmra.mxu0 %v714
        %v742 = vpop.f32.mrf.mxu0
        %v743 = vadd.f32 %v285, %v742
        %744 = vmatmul.f32.gmra.mxu0 %v717
        %v745 = vpop.f32.mrf.mxu0
        %v746 = vadd.f32 %v285, %v745
        %747 = vdwg.mxu0
        %v748 = vtanh.pop %v737
        %v749 = vtanh.pop %v740
        %v750 = vtanh.pop %v743
        %v751 = vtanh.pop %v746
        %v752 = vsel %vm293, %v748, %v737
        %v753 = vsel %vm293, %v749, %v740
        %v754 = vsel %vm293, %v750, %v743
        %v755 = vsel %vm293, %v751, %v746
        %v757 = vsel %vm367, %v752, 0
        %v760 = vsel %vm367, %v753, 0
        %v763 = vsel %vm367, %v754, 0
        %v766 = vsel %vm367, %v755, 0
        %768 = vmatpush.msra.mxu0 0.0
        %769 = vmatpush.msra.mxu0 0.0
        %770 = vmatpush.msra.mxu0 0.0
        %771 = vmatpush.msra.mxu0 0.0
        %772 = vmatpush.msra.mxu0 0.0
        %773 = vmatpush.msra.mxu0 0.0
        %774 = vmatpush.msra.mxu0 0.0
        %775 = vmatpush.msra.mxu0 0.0
        %776 = vmatpush.msra.mxu0 0.0
        %777 = vmatpush.msra.mxu0 0.0
        %778 = vmatpush.msra.mxu0 %v282
        %779 = vmatpush.msra.mxu0 %v281
        %780 = vmatpush.msra.mxu0 %v280
        %781 = vmatpush.msra.mxu0 %v279
        %782 = vmatpush.msra.mxu0 %v278
        %783 = vmatpush.msra.mxu0 %v277
        %784 = vmatmul.f32.gmra.mxu0 %v757
        %v785 = vpop.f32.mrf.mxu0
        %v786 = vadd.f32 %v289, %v785
        %787 = vmatmul.f32.gmra.mxu0 %v760
        %v788 = vpop.f32.mrf.mxu0
        %v789 = vadd.f32 %v289, %v788
        %790 = vmatmul.f32.gmra.mxu0 %v763
        %v791 = vpop.f32.mrf.mxu0
        %v792 = vadd.f32 %v289, %v791
        %793 = vmatmul.f32.gmra.mxu0 %v766
        %v794 = vpop.f32.mrf.mxu0
        %v795 = vadd.f32 %v289, %v794
        %796 = vdwg.mxu0
        %797 = vmatpush.msra.mxu0 0.0
        %798 = vmatpush.msra.mxu0 0.0
        %799 = vmatpush.msra.mxu0 0.0
        %800 = vmatpush.msra.mxu0 0.0
        %801 = vmatpush.msra.mxu0 0.0
        %802 = vmatpush.msra.mxu0 0.0
        %803 = vmatpush.msra.mxu0 0.0
        %804 = vmatpush.msra.mxu0 0.0
        %805 = vmatpush.msra.mxu0 0.0
        %806 = vmatpush.msra.mxu0 0.0
        %807 = vmatpush.msra.mxu0 0.0
        %808 = vmatpush.msra.mxu0 0.0
        %809 = vmatpush.msra.mxu0 %v699
        %810 = vmatpush.msra.mxu0 %v696
        %811 = vmatpush.msra.mxu0 %v693
        %812 = vmatpush.msra.mxu0 %v690
        %813 = vmatmul.f32.gmra.mxu0 %v411
        %v814 = vpop.f32.mrf.mxu0
        %v815 = vadd.f32 %v786, %v814
        %816 = vmatmul.f32.gmra.mxu0 %v414
        %v817 = vpop.f32.mrf.mxu0
        %v818 = vadd.f32 %v789, %v817
        %819 = vmatmul.f32.gmra.mxu0 %v417
        %v820 = vpop.f32.mrf.mxu0
        %v821 = vadd.f32 %v792, %v820
        %822 = vmatmul.f32.gmra.mxu0 %v420
        %v823 = vpop.f32.mrf.mxu0
        %v824 = vadd.f32 %v795, %v823
        %825 = vdwg.mxu0
        %826 = vst.msk [vmem:[#allocation2] sm:$0xff] %vm312, %v815
        %827 = vst.msk [vmem:[#allocation2 + $0x8] sm:$0xff] %vm312, %v818
        %828 = vst.msk [vmem:[#allocation2 + $0x10] sm:$0xff] %vm312, %v821
        %829 = vst.msk [vmem:[#allocation2 + $0x18] sm:$0xff] %vm312, %v824
        %s830 = sand.u32 %s173, 1
        %s831 = scalar_lea.sflag [#allocation4], %s830
        %s832 = sand.u32 %s173, 1
        %s833 = smul.addr %s832, 128
        %s834 = scalar_lea.vmem [#allocation3], %s833
        // Predicated region
        $region49: #{semi_parametric_forward.1} parent=43 // pred_check
          %p835 = pneg %p183
        $region50: #{semi_parametric_forward.1} parent=43 // pred_check_branch
          %837 = sbr.rel (%p835) target = $region52
        $region51: #{semi_parametric_forward.1} parent=43 // pred_region
          #allocation6 [shape = 'u32[6]{0}', space=smem, size = 0x18, scoped, tag = 'DMA stride descriptor']
          %s838 = smul.u32 2, %s24
          %s839 = smul.u32 4, %s25
          %841 = vsyncadd %s831, 0
          %s842 = smul.addr %s839, 2
          %s843 = smul.addr %s838, 16
          %s844 = sadd.s32 %s842, %s843
          %s845 = smul.addr %s844, 8
          %s846 = scalar_lea.hbm %s6, %s845
          %s848 = sshll.u32 1, 14
          %s849 = sxor.u32 4294967295, %s848
          %s852 = sshll.u32 7, 18
          %s853 = sxor.u32 4294967295, %s852
          %s854 = sand.u32 0, %s853
          %s856 = sor.u32 %s854, 0
          %s857 = sshll.u32 %s834, 4
          %s858 = int_to_ptr.vmem [resolvable:$true] %s857
          %s859 = sshll.u32 %s846, 4
          %s860 = int_to_ptr.hbm [resolvable:$true] %s859
          %866 = sst [smem:[#allocation6]] 1024
          %s867 = scalar_lea.smem [#allocation6], 1
          %868 = sst [smem:[%s867]] 2048
          %s869 = scalar_lea.smem [#allocation6], 2
          %870 = sst [smem:[%s869]] 8
          %s871 = scalar_lea.smem [#allocation6], 3
          %872 = sst [smem:[%s871]] 128
          %s873 = scalar_lea.smem [#allocation6], 4
          %874 = sst [smem:[%s873]] 128
          %s875 = scalar_lea.smem [#allocation6], 5
          %876 = sst [smem:[%s875]] 8
          %878 = dma.general %s858, 2048, %s860, %s831, [#allocation5], [#allocation6], %s856, 0
        $region52: #{semi_parametric_forward.1} parent=43 // pred_fallthru
          _
      $region44: #{semi_parametric_forward.1} parent=5 // pred_fallthru
        _
      %p879 = scmp.le.s32.totalorder 2, %s15
      // Predicated region
      $region53: #{semi_parametric_forward.1} parent=5 // pred_check
        %p880 = pneg %p879
      $region54: #{semi_parametric_forward.1} parent=5 // pred_check_branch
        %882 = sbr.rel (%p880) target = $region56
      $region55: #{semi_parametric_forward.1} parent=5 // pred_region
        %s883 = ssub.s32 %s15, 2
        // Predicated region
        $region57: #{semi_parametric_forward.1} parent=55 // pred_check
          %p884 = pneg %p189
        $region58: #{semi_parametric_forward.1} parent=55 // pred_check_branch
          %886 = sbr.rel (%p884) target = $region60
        $region59: #{semi_parametric_forward.1} parent=55 // pred_region
          %s887 = sand.u32 %s174, 1
          %s888 = scalar_lea.sflag [#allocation4], %s887
          %s889 = sand.u32 %s174, 1
          %s890 = smul.addr %s889, 128
          %s891 = scalar_lea.vmem [#allocation3], %s890
          %893 = dma.done %s888, 2048
        $region60: #{semi_parametric_forward.1} parent=55 // pred_fallthru
          _
      $region56: #{semi_parametric_forward.1} parent=5 // pred_fallthru
        _
    $region6: #{semi_parametric_forward.1} parent=1 // loop_footer
      %s19 = sadd.s32 1, %s15
    $region7: #{semi_parametric_forward.1} parent=1 // loop_footer_branch
      %14 = sbr.rel target = $region3
    $region8: #{semi_parametric_forward.1} parent=1 // loop_exit
      _
    %894 = vsyncpa [#allocation4], 1
    %s895 = scalar_lea.sflag [#allocation4], 1
    %896 = vsyncpa %s895, 1

</llo_original>
